<compile_context>
chip_gen: v7x
topology: tpu7x:2x2x1
jax: 0.10.0
libtpu: 0.0.40
codegen_flags: <defaults>
</compile_context>

<pallas_src>
import functools

import jax
import jax.numpy as jnp
from jax.experimental import pallas as pl
from jax.experimental.pallas import tpu as pltpu


def _round_up(n, m):
    return ((n + m - 1) // m) * m


def _choose_row_tile(n, row_tile):
    """Pick the per-grid-step row tile (sublane axis)."""
    n_al = _round_up(max(n, 1), 8)
    tm = _round_up(int(row_tile), 8)
    if tm >= n_al:
        if n_al >= 1024:
            # One tile would cover everything: split in two so the "parallel"
            # grid axis can actually be sharded across v7x's 2 TensorCores.
            tm = _round_up((n_al + 1) // 2, 8)
        else:
            tm = n_al
    return tm


def _vq_kernel(x_ref, g_ref, cbt_ref, cb_ref, csq_ref, q_ref, p_ref, *, inv_temp):
    # x_ref  : (TM, D)  tile of flattened input rows
    # g_ref  : (TM, V)  Gumbel(0,1) noise tile
    # cbt_ref: (D, V)   codebook^T   (precomputed, grid-invariant)
    # cb_ref : (V, D)   codebook
    # csq_ref: (1, V)   ||codebook||^2 per code (precomputed)
    # q_ref  : (TM, D)  quantized output tile
    # p_ref  : (TM, V)  soft-assignment probabilities tile
    x = x_ref[...]                                   # (TM, D) f32
    g = g_ref[...]                                   # (TM, V) f32
    cb_t = cbt_ref[...]                              # (D, V)
    cb = cb_ref[...]                                 # (V, D)
    c_sq = csq_ref[...]                              # (1, V)

    # Euclidean distance via ||x||^2 + ||c||^2 - 2 x.c  (MXU for the dot).
    x_sq = jnp.sum(x * x, axis=-1, keepdims=True)                   # (TM, 1)
    xc = jnp.dot(x, cb_t, preferred_element_type=jnp.float32)       # (TM, V)
    dist = jnp.sqrt(jnp.maximum(x_sq + c_sq - 2.0 * xc, 0.0))       # cdist, p=2

    # gumbel_softmax(-dist, tau=temp, hard=False) along the codebook axis.
    logits = (g - dist) * inv_temp
    logits = logits - jnp.max(logits, axis=-1, keepdims=True)
    e = jnp.exp(logits)
    prob = e / jnp.sum(e, axis=-1, keepdims=True)                   # exact norm

    # quantized = prob @ codebook  (MXU).
    quant = jnp.dot(prob, cb, preferred_element_type=jnp.float32)   # (TM, D)

    q_ref[...] = quant.astype(q_ref.dtype)
    p_ref[...] = prob.astype(p_ref.dtype)


def vector_quantizer_forward(x, codebook, temp, key, *, row_tile=4096):
    """x: (B, T, D) f32, codebook: (V, D) f32.  Returns (quantized, prob)."""
    B, T, D = x.shape
    V = codebook.shape[0]
    N = B * T

    x = x.astype(jnp.float32)
    codebook = codebook.astype(jnp.float32)

    x_flat = x.reshape(N, D)                                    # row-major, no transpose
    gumbel = jax.random.gumbel(key, (N, V), dtype=jnp.float32)  # matches F.gumbel_softmax noise

    cb_t = codebook.T                                           # (D, V), tiny
    c_sq = jnp.sum(codebook * codebook, axis=-1)[None, :]       # (1, V)

    tm = _choose_row_tile(N, row_tile)
    grid = (pl.cdiv(N, tm),)

    kernel = functools.partial(_vq_kernel, inv_temp=1.0 / float(temp))

    cost = pl.CostEstimate(
        flops=4 * N * V * D,                       # two matmuls dominate
        transcendentals=2 * N * V,                 # exp + sqrt
        bytes_accessed=4 * (2 * N * D + 2 * N * V + 2 * V * D + V),
    )

    quant_flat, prob_flat = pl.pallas_call(
        kernel,
        out_shape=(
            jax.ShapeDtypeStruct((N, D), jnp.float32),
            jax.ShapeDtypeStruct((N, V), jnp.float32),
        ),
        grid=grid,
        in_specs=[
            pl.BlockSpec((tm, D), lambda i: (i, 0)),   # x rows tile
            pl.BlockSpec((tm, V), lambda i: (i, 0)),   # gumbel noise tile
            pl.BlockSpec((D, V), lambda i: (0, 0)),    # codebook^T
            pl.BlockSpec((V, D), lambda i: (0, 0)),    # codebook
            pl.BlockSpec((1, V), lambda i: (0, 0)),    # ||c||^2
        ],
        out_specs=(
            pl.BlockSpec((tm, D), lambda i: (i, 0)),
            pl.BlockSpec((tm, V), lambda i: (i, 0)),
        ),
        compiler_params=pltpu.CompilerParams(
            dimension_semantics=("parallel",)),
        cost_estimate=cost,
    )(x_flat, gumbel, cb_t, codebook, c_sq)

    quantized = quant_flat.reshape(B, T, D)
    prob = prob_flat.reshape(B, T, V)
    return quantized, prob


if __name__ == "__main__":
    # Module hyperparameters (small, consistent with the PyTorch module).
    num_vars = 16     # V
    temp = 2.0        # gumbel-softmax temperature
    groups = 2        # TODO(synk): `groups` is unused in the PyTorch forward; kept for parity.
    dim = 32          # D

    batch = 2
    time_steps = 8

    key = jax.random.PRNGKey(0)
    k_x, k_cb, k_noise = jax.random.split(key, 3)

    # Deterministic "parameter" init: codebook ~ randn(num_vars, dim).
    codebook = jax.random.normal(k_cb, (num_vars, dim), dtype=jnp.float32)
    # Example input x: (B, T, D).
    x = jax.random.normal(k_x, (batch, time_steps, dim), dtype=jnp.float32)

    quantized, prob = vector_quantizer_forward(x, codebook, temp, k_noise)
    jax.block_until_ready((quantized, prob))

    assert quantized.shape == (batch, time_steps, dim)
    assert prob.shape == (batch, time_steps, num_vars)
    assert bool(jnp.all(jnp.isfinite(quantized))) and bool(jnp.all(jnp.isfinite(prob)))
    # Probabilities are non-negative and sum to 1 along the codebook axis.
    assert bool(jnp.all(prob >= 0.0))
    assert bool(jnp.allclose(jnp.sum(prob, axis=-1), 1.0, atol=1e-5))

    # Full reference check against a pure-JAX implementation using the SAME
    # Gumbel noise stream (the wrapper samples with this key).
    N = batch * time_steps
    x_flat = x.reshape(N, dim)
    gumbel = jax.random.gumbel(k_noise, (N, num_vars), dtype=jnp.float32)
    diff = x_flat[:, None, :] - codebook[None, :, :]
    ref_dist = jnp.sqrt(jnp.sum(diff * diff, axis=-1))
    ref_prob = jax.nn.softmax((gumbel - ref_dist) / temp, axis=-1)
    ref_quant = ref_prob @ codebook
    assert bool(jnp.allclose(prob.reshape(N, num_vars), ref_prob, atol=2e-3, rtol=2e-3))
    assert bool(jnp.allclose(quantized.reshape(N, dim), ref_quant, atol=2e-3, rtol=2e-3))
    # Quantized output is consistent with the kernel's own prob @ codebook.
    own_quant = (prob.reshape(-1, num_vars) @ codebook).reshape(batch, time_steps, dim)
    assert bool(jnp.allclose(quantized, own_quant, atol=1e-4, rtol=1e-4))

    print("KERNEL_OK")
</pallas_src>

<mosaic_0001>
module attributes {stable_mosaic.version = 11 : i64} {
  func.func @_vq_kernel(%arg0: i32, %arg1: memref<16x32xf32, #tpu.memory_space<vmem>>, %arg2: memref<16x16xf32, #tpu.memory_space<vmem>>, %arg3: memref<32x16xf32, #tpu.memory_space<vmem>>, %arg4: memref<16x32xf32, #tpu.memory_space<vmem>>, %arg5: memref<1x16xf32, #tpu.memory_space<vmem>>, %arg6: memref<16x32xf32, #tpu.memory_space<vmem>>, %arg7: memref<16x16xf32, #tpu.memory_space<vmem>>) attributes {dimension_semantics = [#tpu.dimension_semantics<parallel>], iteration_bounds = array<i64: 1>, scalar_prefetch = 0 : i64, scratch_operands = 0 : i64, tpu.core_type = #tpu.core_type<tc>, window_params = [{transform_indices = @transform_0, window_bounds = array<i64: 16, 32>}, {transform_indices = @transform_1, window_bounds = array<i64: 16, 16>}, {pipeline_mode = #tpu.pipeline_mode<synchronous>, transform_indices = @transform_2, window_bounds = array<i64: 32, 16>}, {pipeline_mode = #tpu.pipeline_mode<synchronous>, transform_indices = @transform_3, window_bounds = array<i64: 16, 32>}, {pipeline_mode = #tpu.pipeline_mode<synchronous>, transform_indices = @transform_4, window_bounds = array<i64: 1, 16>}, {transform_indices = @transform_5, window_bounds = array<i64: 16, 32>}, {transform_indices = @transform_6, window_bounds = array<i64: 16, 16>}]} {
    %c0 = arith.constant 0 : index
    %c0_0 = arith.constant 0 : index
    %0 = vector.load %arg1[%c0, %c0_0] : memref<16x32xf32, #tpu.memory_space<vmem>>, vector<16x32xf32>
    %c0_1 = arith.constant 0 : index
    %c0_2 = arith.constant 0 : index
    %1 = vector.load %arg2[%c0_1, %c0_2] : memref<16x16xf32, #tpu.memory_space<vmem>>, vector<16x16xf32>
    %c0_3 = arith.constant 0 : index
    %c0_4 = arith.constant 0 : index
    %2 = vector.load %arg3[%c0_3, %c0_4] : memref<32x16xf32, #tpu.memory_space<vmem>>, vector<32x16xf32>
    %c0_5 = arith.constant 0 : index
    %c0_6 = arith.constant 0 : index
    %3 = vector.load %arg4[%c0_5, %c0_6] : memref<16x32xf32, #tpu.memory_space<vmem>>, vector<16x32xf32>
    %c0_7 = arith.constant 0 : index
    %c0_8 = arith.constant 0 : index
    %4 = vector.load %arg5[%c0_7, %c0_8] : memref<1x16xf32, #tpu.memory_space<vmem>>, vector<1x16xf32>
    %5 = arith.mulf %0, %0 : vector<16x32xf32>
    %cst = arith.constant dense<0.000000e+00> : vector<16xf32>
    %6 = vector.multi_reduction <add>, %5, %cst [1] : vector<16x32xf32> to vector<16xf32>
    %7 = vector.shape_cast %6 : vector<16xf32> to vector<16x1xf32>
    %cst_9 = arith.constant dense<0.000000e+00> : vector<16x16xf32>
    %8 = tpu.matmul %0, %2, %cst_9 {dimension_numbers = #tpu.dot_dimension_numbers<[1], [0], [0], [1], [0, 0, 1, 1], [], []>} : vector<16x32xf32>, vector<32x16xf32>, vector<16x16xf32> -> vector<16x16xf32>
    %9 = vector.broadcast %7 : vector<16x1xf32> to vector<16x16xf32>
    %10 = vector.broadcast %4 : vector<1x16xf32> to vector<16x16xf32>
    %11 = arith.addf %9, %10 : vector<16x16xf32>
    %cst_10 = arith.constant 2.000000e+00 : f32
    %12 = vector.broadcast %cst_10 : f32 to vector<16x16xf32>
    %13 = arith.mulf %12, %8 : vector<16x16xf32>
    %14 = arith.subf %11, %13 : vector<16x16xf32>
    %cst_11 = arith.constant 0.000000e+00 : f32
    %15 = vector.broadcast %cst_11 : f32 to vector<16x16xf32>
    %16 = arith.maximumf %14, %15 : vector<16x16xf32>
    %17 = math.sqrt %16 : vector<16x16xf32>
    %18 = arith.subf %1, %17 : vector<16x16xf32>
    %cst_12 = arith.constant 5.000000e-01 : f32
    %19 = vector.broadcast %cst_12 : f32 to vector<16x16xf32>
    %20 = arith.mulf %18, %19 : vector<16x16xf32>
    %cst_13 = arith.constant dense<0xFF800000> : vector<16xf32>
    %21 = vector.multi_reduction <maximumf>, %20, %cst_13 [1] : vector<16x16xf32> to vector<16xf32>
    %22 = vector.shape_cast %21 : vector<16xf32> to vector<16x1xf32>
    %23 = vector.broadcast %22 : vector<16x1xf32> to vector<16x16xf32>
    %24 = arith.subf %20, %23 : vector<16x16xf32>
    %25 = math.exp %24 : vector<16x16xf32>
    %cst_14 = arith.constant dense<0.000000e+00> : vector<16xf32>
    %26 = vector.multi_reduction <add>, %25, %cst_14 [1] : vector<16x16xf32> to vector<16xf32>
    %27 = vector.shape_cast %26 : vector<16xf32> to vector<16x1xf32>
    %28 = vector.broadcast %27 : vector<16x1xf32> to vector<16x16xf32>
    %29 = arith.divf %25, %28 : vector<16x16xf32>
    %cst_15 = arith.constant dense<0.000000e+00> : vector<16x32xf32>
    %30 = tpu.matmul %29, %3, %cst_15 {dimension_numbers = #tpu.dot_dimension_numbers<[1], [0], [0], [1], [0, 0, 1, 1], [], []>} : vector<16x16xf32>, vector<16x32xf32>, vector<16x32xf32> -> vector<16x32xf32>
    %c0_16 = arith.constant 0 : index
    %c0_17 = arith.constant 0 : index
    %31 = vector.load %arg6[%c0_16, %c0_17] : memref<16x32xf32, #tpu.memory_space<vmem>>, vector<16x32xf32>
    tpu.vector_store %arg6[%c0_16, %c0_17], %30 {strides = array<i32>} : memref<16x32xf32, #tpu.memory_space<vmem>>, vector<16x32xf32>,
    %c0_18 = arith.constant 0 : index
    %c0_19 = arith.constant 0 : index
    %32 = vector.load %arg7[%c0_18, %c0_19] : memref<16x16xf32, #tpu.memory_space<vmem>>, vector<16x16xf32>
    tpu.vector_store %arg7[%c0_18, %c0_19], %29 {strides = array<i32>} : memref<16x16xf32, #tpu.memory_space<vmem>>, vector<16x16xf32>,
    return
  }
  func.func @transform_0(%arg0: i32) -> (i32, i32) {
    %c0_i32 = arith.constant 0 : i32
    %c0_i32_0 = arith.constant 0 : i32
    return %arg0, %c0_i32 : i32, i32
  }
  func.func @transform_1(%arg0: i32) -> (i32, i32) {
    %c0_i32 = arith.constant 0 : i32
    %c0_i32_0 = arith.constant 0 : i32
    return %arg0, %c0_i32 : i32, i32
  }
  func.func @transform_2(%arg0: i32) -> (i32, i32) {
    %c0_i32 = arith.constant 0 : i32
    %c0_i32_0 = arith.constant 0 : i32
    %c0_i32_1 = arith.constant 0 : i32
    return %c0_i32, %c0_i32_0 : i32, i32
  }
  func.func @transform_3(%arg0: i32) -> (i32, i32) {
    %c0_i32 = arith.constant 0 : i32
    %c0_i32_0 = arith.constant 0 : i32
    %c0_i32_1 = arith.constant 0 : i32
    return %c0_i32, %c0_i32_0 : i32, i32
  }
  func.func @transform_4(%arg0: i32) -> (i32, i32) {
    %c0_i32 = arith.constant 0 : i32
    %c0_i32_0 = arith.constant 0 : i32
    %c0_i32_1 = arith.constant 0 : i32
    return %c0_i32, %c0_i32_0 : i32, i32
  }
  func.func @transform_5(%arg0: i32) -> (i32, i32) {
    %c0_i32 = arith.constant 0 : i32
    %c0_i32_0 = arith.constant 0 : i32
    return %arg0, %c0_i32 : i32, i32
  }
  func.func @transform_6(%arg0: i32) -> (i32, i32) {
    %c0_i32 = arith.constant 0 : i32
    %c0_i32_0 = arith.constant 0 : i32
    return %arg0, %c0_i32 : i32, i32
  }
}

</mosaic_0001>

<llo_original>
// kernel: tpu_custom_call.1
$region0: #{tpu_custom_call.1}
  #allocation0 [shape = 'u32[]', space=smem, size = 0x4, offset = 0x4, fixed_abs, tag = 'smem constant byte address 0x4 - core index']
  #allocation1 [shape = 'u32[144,128]{1,0:T(1,128)}', space=vmem, size = 0x12000, scoped, tag = 'internal scratch']
  %s0 = inlined_call_operand.vmem [shape: f32[16,32], index: 0, kind: input, shape index: {}]
  %s1 = inlined_call_operand.vmem [shape: f32[16,16], index: 1, kind: input, shape index: {}]
  %s2 = inlined_call_operand.vmem [shape: f32[32,16], index: 2, kind: input, shape index: {}]
  %s3 = inlined_call_operand.vmem [shape: f32[16,32], index: 3, kind: input, shape index: {}]
  %s4 = inlined_call_operand.vmem [shape: f32[1,16], index: 4, kind: input, shape index: {}]
  %s5 = inlined_call_operand.hbm [shape: f32[16,32], index: 5, kind: output, shape index: {0}]
  %s6 = inlined_call_operand.hbm [shape: f32[16,16], index: 6, kind: output, shape index: {1}]
  %7 = xla_tuple %s5, %s6
  %s8 = sld [smem:[#allocation0]]
  $region38: #{tpu_custom_call.1} parent=0
    _
  %s10 = ssub.s32 1, %s8
  %s11 = scalar_select 0, %s10, %s8
  $region1: #{tpu_custom_call.1} parent=0
    #allocation2 [shape = 'u8[8192]{0}', space=vmem, size = 0x2000, scoped, tag = 'output window, operand 0, single buffered']
    #allocation3 [shape = 's32[1]{0}', space=sflag, size = 0x4, scoped, tag = 'scoped memory for tpu_custom_call.1']
    #allocation4 [shape = 'u8[8192]{0}', space=vmem, size = 0x2000, scoped, tag = 'output window, operand 1, single buffered']
    #allocation5 [shape = 's32[1]{0}', space=sflag, size = 0x4, scoped, tag = 'scoped memory for tpu_custom_call.1']
    %12 = vsyncpa [#allocation3], 0
    %13 = vsyncpa [#allocation5], 0
    // Predicated region
    $region2: #{tpu_custom_call.1} parent=1 // pred_check
      _
    $region3: #{tpu_custom_call.1} parent=1 // pred_check_branch
      %15 = sbr.rel (0) target = $region5
    $region4: #{tpu_custom_call.1} parent=1 // pred_region
      _
    $region5: #{tpu_custom_call.1} parent=1 // pred_fallthru
      _
    // Predicated region
    $region6: #{tpu_custom_call.1} parent=1 // pred_check
      _
    $region7: #{tpu_custom_call.1} parent=1 // pred_check_branch
      %17 = sbr.rel (0) target = $region9
    $region8: #{tpu_custom_call.1} parent=1 // pred_region
      _
    $region9: #{tpu_custom_call.1} parent=1 // pred_fallthru
      _
    // Predicated region
    $region10: #{tpu_custom_call.1} parent=1 // pred_check
      _
    $region11: #{tpu_custom_call.1} parent=1 // pred_check_branch
      %19 = sbr.rel (0) target = $region13
    $region12: #{tpu_custom_call.1} parent=1 // pred_region
      _
    $region13: #{tpu_custom_call.1} parent=1 // pred_fallthru
      _
    // Predicated region
    $region14: #{tpu_custom_call.1} parent=1 // pred_check
      _
    $region15: #{tpu_custom_call.1} parent=1 // pred_check_branch
      %21 = sbr.rel (0) target = $region17
    $region16: #{tpu_custom_call.1} parent=1 // pred_region
      _
    $region17: #{tpu_custom_call.1} parent=1 // pred_fallthru
      _
    // Predicated region
    $region18: #{tpu_custom_call.1} parent=1 // pred_check
      _
    $region19: #{tpu_custom_call.1} parent=1 // pred_check_branch
      %23 = sbr.rel (0) target = $region21
    $region20: #{tpu_custom_call.1} parent=1 // pred_region
      _
    $region21: #{tpu_custom_call.1} parent=1 // pred_fallthru
      _
    %v24 = vld [vmem:[%s0] sm:$0xff]
    %v25 = vld [vmem:[%s0 + $0x8] sm:$0xff]
    %v26 = vld [vmem:[%s1] sm:$0xff]
    %v27 = vld [vmem:[%s1 + $0x8] sm:$0xff]
    %v28 = vld [vmem:[%s2] sm:$0xff]
    %v29 = vld [vmem:[%s2 + $0x8] sm:$0xff]
    %v30 = vld [vmem:[%s2 + $0x10] sm:$0xff]
    %v31 = vld [vmem:[%s2 + $0x18] sm:$0xff]
    %v32 = vld [vmem:[%s3] sm:$0xff]
    %v33 = vld [vmem:[%s3 + $0x8] sm:$0xff]
    %v34 = vld [vmem:[%s4] sm:$0x1]
    %v35 = vmul.f32 %v24, %v24
    %v36 = vmul.f32 %v25, %v25
    %vm37 = vcmask 261120
    %v38 = vsel %vm37, %v35, 0.0
    %39 = vadd.xlane.f32.xlu0 %v38
    %v40 = vpop.xlane.xlu0 %39
    %v41 = vsel %vm37, %v36, 0.0
    %42 = vadd.xlane.f32.xlu0 %v41
    %v43 = vpop.xlane.xlu0 %42
    %v45 = vsel %vm37, %v24, 0
    %v48 = vsel %vm37, %v25, 0
    %50 = vmatprep.subr.mxu0 0.0
    %51 = vmatpush1.msra.mxu0 %v28
    %52 = vmatprep.subr.mxu0 0.0
    %53 = vmatpush1.msra.mxu0 %v29
    %54 = vmatprep.subr.mxu0 0.0
    %55 = vmatpush1.msra.mxu0 %v30
    %56 = vmatprep.subr.mxu0 0.0
    %57 = vmatpush1.msra.mxu0 %v31
    %58 = vmatprep.subr.mxu0 0.0
    %59 = vmatpush1.msra.mxu0 0.0
    %60 = vmatprep.subr.mxu0 0.0
    %61 = vmatpush1.msra.mxu0 0.0
    %62 = vmatprep.subr.mxu0 0.0
    %63 = vmatpush1.msra.mxu0 0.0
    %64 = vmatprep.subr.mxu0 0.0
    %65 = vmatpush1.msra.mxu0 0.0
    %66 = vmatprep.subr.mxu0 0.0
    %67 = vmatpush1.msra.mxu0 0.0
    %68 = vmatprep.subr.mxu0 0.0
    %69 = vmatpush1.msra.mxu0 0.0
    %70 = vmatprep.subr.mxu0 0.0
    %71 = vmatpush1.msra.mxu0 0.0
    %72 = vmatprep.subr.mxu0 0.0
    %73 = vmatpush1.msra.mxu0 0.0
    %74 = vmatprep.subr.mxu0 0.0
    %75 = vmatpush1.msra.mxu0 0.0
    %76 = vmatprep.subr.mxu0 0.0
    %77 = vmatpush1.msra.mxu0 0.0
    %78 = vmatprep.subr.mxu0 0.0
    %79 = vmatpush1.msra.mxu0 0.0
    %80 = vmatprep.subr.mxu0 0.0
    %81 = vmatpush1.msra.mxu0 0.0
    %82 = vmatprep.subr.mxu0 0.0
    %83 = vmatpush1.msra.mxu0 0.0
    %84 = vmatprep.subr.mxu0 0.0
    %85 = vmatpush1.msra.mxu0 0.0
    %86 = vmatprep.subr.mxu0 0.0
    %87 = vmatpush1.msra.mxu0 0.0
    %88 = vmatprep.subr.mxu0 0.0
    %89 = vmatpush1.msra.mxu0 0.0
    %90 = vmatprep.subr.mxu0 0.0
    %91 = vmatpush1.msra.mxu0 0.0
    %92 = vmatprep.subr.mxu0 0.0
    %93 = vmatpush1.msra.mxu0 0.0
    %94 = vmatprep.subr.mxu0 0.0
    %95 = vmatpush1.msra.mxu0 0.0
    %96 = vmatprep.subr.mxu0 0.0
    %97 = vmatpush1.msra.mxu0 0.0
    %98 = vmatprep.subr.mxu0 0.0
    %99 = vmatpush1.msra.mxu0 0.0
    %100 = vmatprep.subr.mxu0 0.0
    %101 = vmatpush1.msra.mxu0 0.0
    %102 = vmatprep.subr.mxu0 0.0
    %103 = vmatpush1.msra.mxu0 0.0
    %104 = vmatprep.subr.mxu0 0.0
    %105 = vmatpush1.msra.mxu0 0.0
    %106 = vmatprep.subr.mxu0 0.0
    %107 = vmatpush1.msra.mxu0 0.0
    %108 = vmatprep.subr.mxu0 0.0
    %109 = vmatpush1.msra.mxu0 0.0
    %110 = vmatprep.subr.mxu0 0.0
    %111 = vmatpush1.msra.mxu0 0.0
    %112 = vmatprep.subr.mxu0 0.0
    %113 = vmatpush1.msra.mxu0 0.0
    %114 = vmatprep.mubr.f32.mxu0 0.0
    %115 = vmatmul.mubr.f32.gmra.mrb[0].mxu0 %v45
    %v116 = vpop.f32.mrb[0].mxu0
    %v117 = vadd.f32 0.0, %v116
    %v118 = vpop.f32.mrb[0].mxu0
    %119 = vmatprep.mubr.f32.mxu0 0.0
    %120 = vmatmul.mubr.f32.gmra.mrb[0].mxu0 %v48
    %v121 = vpop.f32.mrb[0].mxu0
    %v122 = vadd.f32 0.0, %v121
    %v123 = vpop.f32.mrb[0].mxu0
    %124 = vdwg.mxu0
    %v126 = vlaneseq
    %v127 = vshrl.u32 %v126, 7
    %v128 = vsub.s32 0, %v127
    %v129 = vrot.slane %v34, %v128
    %v131 = vadd.f32 %v40, %v129
    %v132 = vadd.f32 %v43, %v129
    %v133 = vmul.f32 %v117, 2.0
    %v134 = vmul.f32 %v122, 2.0
    %v135 = vsub.f32 %v131, %v133
    %v136 = vsub.f32 %v132, %v134
    %v137 = vmax.f32 %v135, 0.0
    %v138 = vmax.f32 %v136, 0.0
    %v139 = vrsqrt.pop %v137
    %v140 = vmul.f32 %v137, %v139
    %vm141 = vcmp.eq.f32.partialorder %v137, inf
    %v142 = vsel %vm141, %v137, %v140
    %vm143 = vcmp.eq.f32.partialorder %v137, 0.0
    %v144 = vand.u32 %v137, 2147483648
    %v145 = vsel %vm143, %v144, %v142
    %v146 = vrsqrt.pop %v138
    %v147 = vmul.f32 %v138, %v146
    %vm148 = vcmp.eq.f32.partialorder %v138, inf
    %v149 = vsel %vm148, %v138, %v147
    %vm150 = vcmp.eq.f32.partialorder %v138, 0.0
    %v151 = vand.u32 %v138, 2147483648
    %v152 = vsel %vm150, %v151, %v149
    %v153 = vsub.f32 %v26, %v145
    %v154 = vsub.f32 %v27, %v152
    %v155 = vmul.f32 %v153, 0.5
    %v156 = vmul.f32 %v154, 0.5
    %vm157 = vcmask 130048
    %v158 = vsel %vm157, %v155, -inf
    %159 = vmax.xlane.f32.xlu0 %v158
    %v160 = vpop.xlane.xlu0 %159
    %v161 = vsel %vm157, %v156, -inf
    %162 = vmax.xlane.f32.xlu0 %v161
    %v163 = vpop.xlane.xlu0 %162
    %v164 = vsub.f32 %v155, %v160
    %v165 = vsub.f32 %v156, %v163
    %v166 = vmul.f32 %v164, 1.442695
    %v167 = vpow.pop %v166
    %v168 = vmul.f32 %v165, 1.442695
    %v169 = vpow.pop %v168
    %v170 = vsel %vm157, %v167, 0.0
    %171 = vadd.xlane.f32.xlu0 %v170
    %v172 = vpop.xlane.xlu0 %171
    %v173 = vsel %vm157, %v169, 0.0
    %174 = vadd.xlane.f32.xlu0 %v173
    %v175 = vpop.xlane.xlu0 %174
    %v176 = vrcp.pop %v172
    %v177 = vmul.f32 %v167, %v176
    %v178 = vrcp.pop %v175
    %v179 = vmul.f32 %v169, %v178
    %v181 = vsel %vm157, %v177, 0
    %v184 = vsel %vm157, %v179, 0
    %186 = vmatprep.subr.mxu0 0.0
    %187 = vmatpush1.msra.mxu0 %v32
    %188 = vmatprep.subr.mxu0 0.0
    %189 = vmatpush1.msra.mxu0 %v33
    %190 = vmatprep.subr.mxu0 0.0
    %191 = vmatpush1.msra.mxu0 0.0
    %192 = vmatprep.subr.mxu0 0.0
    %193 = vmatpush1.msra.mxu0 0.0
    %194 = vmatprep.subr.mxu0 0.0
    %195 = vmatpush1.msra.mxu0 0.0
    %196 = vmatprep.subr.mxu0 0.0
    %197 = vmatpush1.msra.mxu0 0.0
    %198 = vmatprep.subr.mxu0 0.0
    %199 = vmatpush1.msra.mxu0 0.0
    %200 = vmatprep.subr.mxu0 0.0
    %201 = vmatpush1.msra.mxu0 0.0
    %202 = vmatprep.subr.mxu0 0.0
    %203 = vmatpush1.msra.mxu0 0.0
    %204 = vmatprep.subr.mxu0 0.0
    %205 = vmatpush1.msra.mxu0 0.0
    %206 = vmatprep.subr.mxu0 0.0
    %207 = vmatpush1.msra.mxu0 0.0
    %208 = vmatprep.subr.mxu0 0.0
    %209 = vmatpush1.msra.mxu0 0.0
    %210 = vmatprep.subr.mxu0 0.0
    %211 = vmatpush1.msra.mxu0 0.0
    %212 = vmatprep.subr.mxu0 0.0
    %213 = vmatpush1.msra.mxu0 0.0
    %214 = vmatprep.subr.mxu0 0.0
    %215 = vmatpush1.msra.mxu0 0.0
    %216 = vmatprep.subr.mxu0 0.0
    %217 = vmatpush1.msra.mxu0 0.0
    %218 = vmatprep.subr.mxu0 0.0
    %219 = vmatpush1.msra.mxu0 0.0
    %220 = vmatprep.subr.mxu0 0.0
    %221 = vmatpush1.msra.mxu0 0.0
    %222 = vmatprep.subr.mxu0 0.0
    %223 = vmatpush1.msra.mxu0 0.0
    %224 = vmatprep.subr.mxu0 0.0
    %225 = vmatpush1.msra.mxu0 0.0
    %226 = vmatprep.subr.mxu0 0.0
    %227 = vmatpush1.msra.mxu0 0.0
    %228 = vmatprep.subr.mxu0 0.0
    %229 = vmatpush1.msra.mxu0 0.0
    %230 = vmatprep.subr.mxu0 0.0
    %231 = vmatpush1.msra.mxu0 0.0
    %232 = vmatprep.subr.mxu0 0.0
    %233 = vmatpush1.msra.mxu0 0.0
    %234 = vmatprep.subr.mxu0 0.0
    %235 = vmatpush1.msra.mxu0 0.0
    %236 = vmatprep.subr.mxu0 0.0
    %237 = vmatpush1.msra.mxu0 0.0
    %238 = vmatprep.subr.mxu0 0.0
    %239 = vmatpush1.msra.mxu0 0.0
    %240 = vmatprep.subr.mxu0 0.0
    %241 = vmatpush1.msra.mxu0 0.0
    %242 = vmatprep.subr.mxu0 0.0
    %243 = vmatpush1.msra.mxu0 0.0
    %244 = vmatprep.subr.mxu0 0.0
    %245 = vmatpush1.msra.mxu0 0.0
    %246 = vmatprep.subr.mxu0 0.0
    %247 = vmatpush1.msra.mxu0 0.0
    %248 = vmatprep.subr.mxu0 0.0
    %249 = vmatpush1.msra.mxu0 0.0
    %250 = vmatprep.mubr.f32.mxu0 0.0
    %251 = vmatmul.mubr.f32.gmra.mrb[0].mxu0 %v181
    %v252 = vpop.f32.mrb[0].mxu0
    %v253 = vadd.f32 0.0, %v252
    %v254 = vpop.f32.mrb[0].mxu0
    %255 = vmatprep.mubr.f32.mxu0 0.0
    %256 = vmatmul.mubr.f32.gmra.mrb[0].mxu0 %v184
    %v257 = vpop.f32.mrb[0].mxu0
    %v258 = vadd.f32 0.0, %v257
    %v259 = vpop.f32.mrb[0].mxu0
    %260 = vdwg.mxu0
    %261 = vst.msk [vmem:[#allocation2] sm:$0xff] %vm37, %v253
    %262 = vst.msk [vmem:[#allocation2 + $0x8] sm:$0xff] %vm37, %v258
    %263 = vst.msk [vmem:[#allocation4] sm:$0xff] %vm157, %v177
    %264 = vst.msk [vmem:[#allocation4 + $0x8] sm:$0xff] %vm157, %v179
    // Predicated region
    $region22: #{tpu_custom_call.1} parent=1 // pred_check
      _
    $region23: #{tpu_custom_call.1} parent=1 // pred_check_branch
      %266 = sbr.rel (0) target = $region25
    $region24: #{tpu_custom_call.1} parent=1 // pred_region
      %s268 = ssub.s32 256, 256
      %269 = vsyncadd [#allocation3], %s268
      %s270 = sshll.u32 [#allocation2], 4
      %s271 = int_to_ptr.vmem [resolvable:$true] %s270
      %276 = dma.vmem_to_hbm [thread:$0]  %s271, 256, %s5, [#allocation3], 128, 128, 8
    $region25: #{tpu_custom_call.1} parent=1 // pred_fallthru
      _
    // Predicated region
    $region26: #{tpu_custom_call.1} parent=1 // pred_check
      _
    $region27: #{tpu_custom_call.1} parent=1 // pred_check_branch
      %278 = sbr.rel (0) target = $region29
    $region28: #{tpu_custom_call.1} parent=1 // pred_region
      %s280 = ssub.s32 256, 256
      %281 = vsyncadd [#allocation5], %s280
      %s282 = sshll.u32 [#allocation4], 4
      %s283 = int_to_ptr.vmem [resolvable:$true] %s282
      %288 = dma.vmem_to_hbm [thread:$0]  %s283, 256, %s6, [#allocation5], 128, 128, 8
    $region29: #{tpu_custom_call.1} parent=1 // pred_fallthru
      _
    // Predicated region
    $region30: #{tpu_custom_call.1} parent=1 // pred_check
      _
    $region31: #{tpu_custom_call.1} parent=1 // pred_check_branch
      %290 = sbr.rel (0) target = $region33
    $region32: #{tpu_custom_call.1} parent=1 // pred_region
      %291 = dma.done [#allocation3], 256
    $region33: #{tpu_custom_call.1} parent=1 // pred_fallthru
      _
    // Predicated region
    $region34: #{tpu_custom_call.1} parent=1 // pred_check
      _
    $region35: #{tpu_custom_call.1} parent=1 // pred_check_branch
      %293 = sbr.rel (0) target = $region37
    $region36: #{tpu_custom_call.1} parent=1 // pred_region
      %294 = dma.done [#allocation5], 256
    $region37: #{tpu_custom_call.1} parent=1 // pred_fallthru
      _
    %295 = vsyncpa [#allocation3], 1
    %296 = vsyncpa [#allocation5], 1

</llo_original>
